<compile_context>
chip_gen: v6e
topology: v6e:2x2x1
jax: 0.10.0
libtpu: 0.0.40
codegen_flags: <defaults>
</compile_context>

<pallas_src>
import functools

import jax
import jax.numpy as jnp
import numpy as np
from jax.experimental import pallas as pl
from jax.experimental.pallas import tpu as pltpu


# ---------------------------------------------------------------------------
# Pallas kernel
# ---------------------------------------------------------------------------
def _random_relu_kernel(x_ref, s_ref, o_ref):
    x = x_ref[...]                       # (TR, TL) tile of the flattened input
    s = s_ref[...]                       # (TR, 1) per-row (== per-channel) slope
    # Literal form of the PyTorch forward: F.relu(x) - slope * F.relu(-x)
    o_ref[...] = jnp.maximum(x, 0) - s * jnp.maximum(-x, 0)


def _tile(full, unit, cap):
    """Largest legal block extent: the full dim if it fits, else the largest
    multiple of `unit` <= cap (trailing partial blocks are padded/masked)."""
    if full <= cap:
        return full
    return max(unit, (cap // unit) * unit)


@jax.jit
def random_relu(x, negative_slope):
    """x: (N, C, H, W); negative_slope: (1, C, 1, 1). Returns same shape/dtype."""
    N, C, H, W = x.shape
    M, L = N * C, H * W

    x2 = x.reshape(M, L)                 # contiguous reshape; spatial axis -> lanes
    # One slope per row; row index = (n, c), so tile the C slopes over N.
    slopes = jnp.broadcast_to(negative_slope.reshape(1, C), (N, C))
    slopes = slopes.reshape(M, 1).astype(x.dtype)

    itemsize = jnp.dtype(x.dtype).itemsize
    # Sublane packing unit: 8 rows for 4-byte, 16 for 2-byte, 32 for 1-byte dtypes.
    row_unit = 8 * max(1, 4 // itemsize)

    # Lane tile: big (>=512 lanes when available) for unmasked, lane-dense
    # stores and near-roofline HBM streaming.
    TL = _tile(L, 128, 2048)
    # Row tile: cap each (TR, TL) tile at ~2 MiB so double-buffered in+out
    # tiles (~4x) stay ~8 MiB, comfortably inside even v5e's 16 MiB scoped
    # VMEM default -- no vmem_limit_bytes override needed.
    max_tile_bytes = 2 * 1024 * 1024
    tr_cap = max(row_unit,
                 ((max_tile_bytes // (TL * itemsize)) // row_unit) * row_unit)
    TR = _tile(M, row_unit, tr_cap)

    grid = (pl.cdiv(M, TR), pl.cdiv(L, TL))

    out = pl.pallas_call(
        _random_relu_kernel,
        out_shape=jax.ShapeDtypeStruct((M, L), x.dtype),
        grid=grid,
        in_specs=[
            pl.BlockSpec((TR, TL), lambda i, j: (i, j)),
            pl.BlockSpec((TR, 1), lambda i, j: (i, 0)),
        ],
        out_specs=pl.BlockSpec((TR, TL), lambda i, j: (i, j)),
        compiler_params=pltpu.CompilerParams(
            dimension_semantics=("parallel", "parallel")),
    )(x2, slopes)
    return out.reshape(N, C, H, W)


# ---------------------------------------------------------------------------
# Module params + pure-JAX reference (matches the PyTorch forward exactly)
# ---------------------------------------------------------------------------
def init_params(key, fan_in, lower=0.125, upper=0.333):
    # nn.init.uniform_(negative_slope, lower, upper), shape (1, fan_in, 1, 1)
    return jax.random.uniform(key, (1, fan_in, 1, 1), jnp.float32, lower, upper)


def reference(x, negative_slope):
    return jax.nn.relu(x) - negative_slope * jax.nn.relu(-x)


if __name__ == "__main__":
    key = jax.random.PRNGKey(0)
    pkey, xkey = jax.random.split(key)

    N, C, H, W = 2, 4, 16, 16            # small shapes; fan_in == C
    negative_slope = init_params(pkey, C)
    x = jax.random.normal(xkey, (N, C, H, W), jnp.float32)

    out = jax.block_until_ready(random_relu(x, negative_slope))
    assert out.shape == (N, C, H, W)
    assert out.dtype == x.dtype

    ref = jax.block_until_ready(reference(x, negative_slope))
    np.testing.assert_allclose(np.asarray(out), np.asarray(ref),
                               rtol=1e-6, atol=1e-6)

    print("KERNEL_OK")
</pallas_src>

<mosaic_0001>
module attributes {stable_mosaic.version = 11 : i64} {
  func.func @_random_relu_kernel(%arg0: i32, %arg1: i32, %arg2: memref<8x256xf32, #tpu.memory_space<vmem>>, %arg3: memref<8x1xf32, #tpu.memory_space<vmem>>, %arg4: memref<8x256xf32, #tpu.memory_space<vmem>>) attributes {dimension_semantics = [#tpu.dimension_semantics<parallel>, #tpu.dimension_semantics<parallel>], iteration_bounds = array<i64: 1, 1>, scalar_prefetch = 0 : i64, scratch_operands = 0 : i64, tpu.core_type = #tpu.core_type<tc>, window_params = [{transform_indices = @transform_0, window_bounds = array<i64: 8, 256>}, {transform_indices = @transform_1, window_bounds = array<i64: 8, 1>}, {transform_indices = @transform_2, window_bounds = array<i64: 8, 256>}]} {
    %c0 = arith.constant 0 : index
    %c0_0 = arith.constant 0 : index
    %0 = vector.load %arg2[%c0, %c0_0] : memref<8x256xf32, #tpu.memory_space<vmem>>, vector<8x256xf32>
    %c0_1 = arith.constant 0 : index
    %c0_2 = arith.constant 0 : index
    %1 = vector.load %arg3[%c0_1, %c0_2] : memref<8x1xf32, #tpu.memory_space<vmem>>, vector<8x1xf32>
    %cst = arith.constant 0.000000e+00 : f32
    %2 = vector.broadcast %cst : f32 to vector<8x256xf32>
    %3 = arith.maximumf %0, %2 : vector<8x256xf32>
    %cst_3 = arith.constant 0.000000e+00 : f32
    %4 = vector.broadcast %cst_3 : f32 to vector<8x256xf32>
    %5 = arith.subf %4, %0 : vector<8x256xf32>
    %cst_4 = arith.constant 0.000000e+00 : f32
    %6 = vector.broadcast %cst_4 : f32 to vector<8x256xf32>
    %7 = arith.maximumf %5, %6 : vector<8x256xf32>
    %8 = vector.broadcast %1 : vector<8x1xf32> to vector<8x256xf32>
    %9 = arith.mulf %8, %7 : vector<8x256xf32>
    %10 = arith.subf %3, %9 : vector<8x256xf32>
    %c0_5 = arith.constant 0 : index
    %c0_6 = arith.constant 0 : index
    %11 = vector.load %arg4[%c0_5, %c0_6] : memref<8x256xf32, #tpu.memory_space<vmem>>, vector<8x256xf32>
    tpu.vector_store %arg4[%c0_5, %c0_6], %10 {strides = array<i32>} : memref<8x256xf32, #tpu.memory_space<vmem>>, vector<8x256xf32>,
    return
  }
  func.func @transform_0(%arg0: i32, %arg1: i32) -> (i32, i32) {
    %c0_i32 = arith.constant 0 : i32
    return %arg0, %arg1 : i32, i32
  }
  func.func @transform_1(%arg0: i32, %arg1: i32) -> (i32, i32) {
    %c0_i32 = arith.constant 0 : i32
    %c0_i32_0 = arith.constant 0 : i32
    return %arg0, %c0_i32 : i32, i32
  }
  func.func @transform_2(%arg0: i32, %arg1: i32) -> (i32, i32) {
    %c0_i32 = arith.constant 0 : i32
    return %arg0, %arg1 : i32, i32
  }
}

</mosaic_0001>

<llo_original>
// kernel: random_relu.1
$region0: #{random_relu.1}
  #allocation0 [shape = 'u32[]', space=smem, size = 0x4, offset = 0x4, fixed_abs, tag = 'smem constant byte address 0x4 - core index']
  #allocation1 [shape = 'u32[144,128]{1,0:T(1,128)}', space=vmem, size = 0x12000, scoped, tag = 'internal scratch']
  %s0 = inlined_call_operand.vmem [shape: f32[8,256], index: 0, kind: input, shape index: {}]
  %s1 = inlined_call_operand.vmem [shape: f32[8,1], index: 1, kind: input, shape index: {}]
  %s2 = inlined_call_operand.vmem [shape: f32[8,256], index: 2, kind: output, shape index: {}]
  %s3 = sld [smem:[#allocation0]]
  $region18: #{random_relu.1} parent=0
    _
  %s5 = ssub.s32 1, %s3
  %s6 = scalar_select 0, %s5, %s3
  // Predicated region
  $region2: #{random_relu.1} parent=0 // pred_check
    _
  $region3: #{random_relu.1} parent=0 // pred_check_branch
    %8 = sbr.rel (0) target = $region5
  $region4: #{random_relu.1} parent=0 // pred_region
    _
  $region5: #{random_relu.1} parent=0 // pred_fallthru
    _
  // Predicated region
  $region6: #{random_relu.1} parent=0 // pred_check
    _
  $region7: #{random_relu.1} parent=0 // pred_check_branch
    %10 = sbr.rel (0) target = $region9
  $region8: #{random_relu.1} parent=0 // pred_region
    _
  $region9: #{random_relu.1} parent=0 // pred_fallthru
    _
  %v11 = vld [vmem:[%s0] sm:$0xff]
  %v12 = vld [vmem:[%s0 + $0x8] sm:$0xff]
  %v13 = vld [vmem:[%s1] sm:$0xff]
  %v14 = vmax.f32 %v11, 0.0
  %v15 = vmax.f32 %v12, 0.0
  %v16 = vsub.f32 0.0, %v11
  %v17 = vsub.f32 0.0, %v12
  %v18 = vmax.f32 %v16, 0.0
  %v19 = vmax.f32 %v17, 0.0
  %21 = vset.pattern.permute.xlu0 0
  %22 = vperm.xlu0 %21, %v13
  %v23 = vpop.permute.xlu0 %22
  %v25 = vmul.f32 %v23, %v18
  %v26 = vmul.f32 %v23, %v19
  %v27 = vsub.f32 %v14, %v25
  %v28 = vsub.f32 %v15, %v26
  %29 = vst [vmem:[%s2] sm:$0xff] %v27
  %30 = vst [vmem:[%s2 + $0x8] sm:$0xff] %v28
  // Predicated region
  $region10: #{random_relu.1} parent=0 // pred_check
    _
  $region11: #{random_relu.1} parent=0 // pred_check_branch
    %32 = sbr.rel (0) target = $region13
  $region12: #{random_relu.1} parent=0 // pred_region
    _
  $region13: #{random_relu.1} parent=0 // pred_fallthru
    _
  // Predicated region
  $region14: #{random_relu.1} parent=0 // pred_check
    _
  $region15: #{random_relu.1} parent=0 // pred_check_branch
    %34 = sbr.rel (0) target = $region17
  $region16: #{random_relu.1} parent=0 // pred_region
    _
  $region17: #{random_relu.1} parent=0 // pred_fallthru
    _

</llo_original>
